<compile_context>
chip_gen: v7x
topology: tpu7x:2x2x1
jax: 0.10.0
libtpu: 0.0.40
codegen_flags: <defaults>
</compile_context>

<pallas_src>
import math

import jax
import jax.numpy as jnp
from jax.experimental import pallas as pl
from jax.experimental.pallas import tpu as pltpu


_VMEM_LIMIT_BYTES = 48 * 1024 * 1024    # explicit scoped-VMEM limit (safe on v5e/v6e/v7x)
_BLOCK_BUDGET_BYTES = 8 * 1024 * 1024   # sum-of-blocks per grid step (x2 when double-buffered)


def _copy_into(o_ref, x_ref, c_lo, off_h, off_w):
    """Copy one input's block into o_ref channels [c_lo, c_lo + c), zero-filling
    the leading pad strips.  All offsets/sizes are static Python ints, so this
    lowers to plain (possibly masked) VMEM stores -- no concatenated temporary."""
    nb = o_ref.shape[0]
    c = x_ref.shape[1]
    c_hi = c_lo + c
    dt = o_ref.dtype
    if len(o_ref.shape) == 3:
        # Lane-dense layout (nb, channels, H*W); a W pad is impossible here,
        # the H pad is a flat leading offset off_h = ph * W.
        if off_h:
            o_ref[:, c_lo:c_hi, :off_h] = jnp.zeros((nb, c, off_h), dt)
        o_ref[:, c_lo:c_hi, off_h:] = x_ref[...]
    else:
        # NCHW layout (nb, channels, Hm, Wm): zero the two pad strips, then one
        # direct sliced store of the data at static (off_h, off_w).
        Wm = o_ref.shape[-1]
        H = x_ref.shape[-2]
        if off_h:
            o_ref[:, c_lo:c_hi, :off_h, :] = jnp.zeros((nb, c, off_h, Wm), dt)
        if off_w:
            o_ref[:, c_lo:c_hi, off_h:, :off_w] = jnp.zeros((nb, c, H, off_w), dt)
        o_ref[:, c_lo:c_hi, off_h:, off_w:] = x_ref[...]


def _pick_channel_tile(gcd_c, flat, per_chan_bytes, budget, c1, c2):
    """Largest channel tile that (a) divides both channel counts, (b) keeps the
    per-step block footprint under `budget`, and (c) in the lane-dense layout
    is sublane-legal (multiple of 8, or equal to both full channel extents).
    Returns None if (c) cannot be met."""
    divs = [d for d in range(1, gcd_c + 1) if gcd_c % d == 0]
    if flat:
        divs = [d for d in divs if d % 8 == 0 or (d == c1 and d == c2)]
        if not divs:
            return None
    fitting = [d for d in divs if d * per_chan_bytes <= budget]
    return max(fitting) if fitting else min(divs)


def _compiler_params(num_axes):
    return pltpu.CompilerParams(
        dimension_semantics=("parallel",) * num_axes,
        vmem_limit_bytes=_VMEM_LIMIT_BYTES)


def concat_and_pad2d(x1, x2):
    """Pallas implementation of ConcatAndPad2d.forward(x1, x2, dim=1)."""
    N, C1, H1, W1 = x1.shape
    N2, C2, H2, W2 = x2.shape
    assert N == N2, "batch dims must match"
    assert x1.dtype == x2.dtype, "dtypes must match"
    dtype = x1.dtype
    itemsize = jnp.dtype(dtype).itemsize

    Hm, Wm = max(H1, H2), max(W1, W2)
    ph1, pw1 = Hm - H1, Wm - W1          # leading pads applied to x1 (0 if x1 larger)
    ph2, pw2 = Hm - H2, Wm - W2          # leading pads applied to x2
    Ct = C1 + C2

    flat = (W1 == W2)                    # lane-dense (N, C, H*W) view possible
    per_batch = itemsize * (C1 * H1 * W1 + C2 * H2 * W2 + Ct * Hm * Wm)
    per_chan = itemsize * (H1 * W1 + H2 * W2 + Hm * Wm)

    # ---------------- small path: untiled channels, whole-array blocks ----------------
    if per_batch <= _BLOCK_BUDGET_BYTES:
        nb = N if N * per_batch <= _BLOCK_BUDGET_BYTES else 1
        grid = (N // nb,)

        if flat:
            L1, L2, Lm = H1 * W1, H2 * W2, Hm * Wm
            off1, off2 = ph1 * W1, ph2 * W2

            def kernel(x1_ref, x2_ref, o_ref):
                _copy_into(o_ref, x1_ref, 0, off1, 0)
                _copy_into(o_ref, x2_ref, C1, off2, 0)

            out = pl.pallas_call(
                kernel,
                out_shape=jax.ShapeDtypeStruct((N, Ct, Lm), dtype),
                grid=grid,
                in_specs=[
                    pl.BlockSpec((nb, C1, L1), lambda b: (b, 0, 0)),
                    pl.BlockSpec((nb, C2, L2), lambda b: (b, 0, 0)),
                ],
                out_specs=pl.BlockSpec((nb, Ct, Lm), lambda b: (b, 0, 0)),
                compiler_params=_compiler_params(1),
            )(x1.reshape(N, C1, L1), x2.reshape(N, C2, L2))
            return out.reshape(N, Ct, Hm, Wm)

        def kernel(x1_ref, x2_ref, o_ref):
            _copy_into(o_ref, x1_ref, 0, ph1, pw1)
            _copy_into(o_ref, x2_ref, C1, ph2, pw2)

        return pl.pallas_call(
            kernel,
            out_shape=jax.ShapeDtypeStruct((N, Ct, Hm, Wm), dtype),
            grid=grid,
            in_specs=[
                pl.BlockSpec((nb, C1, H1, W1), lambda b: (b, 0, 0, 0)),
                pl.BlockSpec((nb, C2, H2, W2), lambda b: (b, 0, 0, 0)),
            ],
            out_specs=pl.BlockSpec((nb, Ct, Hm, Wm), lambda b: (b, 0, 0, 0)),
            compiler_params=_compiler_params(1),
        )(x1, x2)

    # ---------------- large path: phased channel tiling, grid = (N, T1 + T2) ----------------
    g = math.gcd(C1, C2)
    tc = _pick_channel_tile(g, flat, per_chan, _BLOCK_BUDGET_BYTES, C1, C2)
    flat_t = flat
    if tc is None:                       # no sublane-legal flat tile -> fall back to NCHW tiling
        flat_t = False
        tc = _pick_channel_tile(g, False, per_chan, _BLOCK_BUDGET_BYTES, C1, C2)
    T1, T2 = C1 // tc, C2 // tc          # output channel block t<T1 -> x1 tile t, else x2 tile t-T1

    if flat_t:
        L1, L2, Lm = H1 * W1, H2 * W2, Hm * Wm
        off1, off2 = ph1 * W1, ph2 * W2

        def kernel(x1_ref, x2_ref, o_ref):
            t = pl.program_id(1)

            @pl.when(t < T1)
            def _():
                _copy_into(o_ref, x1_ref, 0, off1, 0)

            @pl.when(t >= T1)
            def _():
                _copy_into(o_ref, x2_ref, 0, off2, 0)

        out = pl.pallas_call(
            kernel,
            out_shape=jax.ShapeDtypeStruct((N, Ct, Lm), dtype),
            grid=(N, T1 + T2),
            in_specs=[
                # Clamped index maps: the unused input's block index never
                # changes during the other phase, so Pallas skips its DMA.
                pl.BlockSpec((1, tc, L1),
                             lambda n, t: (n, jnp.minimum(t, T1 - 1), 0)),
                pl.BlockSpec((1, tc, L2),
                             lambda n, t: (n, jnp.maximum(t - T1, 0), 0)),
            ],
            out_specs=pl.BlockSpec((1, tc, Lm), lambda n, t: (n, t, 0)),
            compiler_params=_compiler_params(2),
        )(x1.reshape(N, C1, L1), x2.reshape(N, C2, L2))
        return out.reshape(N, Ct, Hm, Wm)

    def kernel(x1_ref, x2_ref, o_ref):
        t = pl.program_id(1)

        @pl.when(t < T1)
        def _():
            _copy_into(o_ref, x1_ref, 0, ph1, pw1)

        @pl.when(t >= T1)
        def _():
            _copy_into(o_ref, x2_ref, 0, ph2, pw2)

    return pl.pallas_call(
        kernel,
        out_shape=jax.ShapeDtypeStruct((N, Ct, Hm, Wm), dtype),
        grid=(N, T1 + T2),
        in_specs=[
            pl.BlockSpec((1, tc, H1, W1),
                         lambda n, t: (n, jnp.minimum(t, T1 - 1), 0, 0)),
            pl.BlockSpec((1, tc, H2, W2),
                         lambda n, t: (n, jnp.maximum(t - T1, 0), 0, 0)),
        ],
        out_specs=pl.BlockSpec((1, tc, Hm, Wm), lambda n, t: (n, t, 0, 0)),
        compiler_params=_compiler_params(2),
    )(x1, x2)


def _reference(x1, x2):
    """Pure-JAX reference mirroring the PyTorch forward (dim=1)."""
    _, _, H1, W1 = x1.shape
    _, _, H2, W2 = x2.shape
    dh, dw = abs(H1 - H2), abs(W1 - W2)
    if dw:
        if W1 < W2:
            x1 = jnp.pad(x1, ((0, 0), (0, 0), (0, 0), (dw, 0)))
        else:
            x2 = jnp.pad(x2, ((0, 0), (0, 0), (0, 0), (dw, 0)))
    if dh:
        if H1 < H2:
            x1 = jnp.pad(x1, ((0, 0), (0, 0), (dh, 0), (0, 0)))
        else:
            x2 = jnp.pad(x2, ((0, 0), (0, 0), (dh, 0), (0, 0)))
    return jnp.concatenate([x1, x2], axis=1)


if __name__ == "__main__":
    key = jax.random.PRNGKey(0)
    k1, k2, k3, k4, k5, k6, k7, k8 = jax.random.split(key, 8)

    # Case 1: H and W both differ (x2 smaller) -> NCHW path with H+W pad strips.
    x1 = jax.random.normal(k1, (2, 4, 16, 16), dtype=jnp.float32)
    x2 = jax.random.normal(k2, (2, 6, 14, 12), dtype=jnp.float32)
    out1 = jax.block_until_ready(concat_and_pad2d(x1, x2))
    assert out1.shape == (2, 10, 16, 16), out1.shape
    assert jnp.array_equal(out1, _reference(x1, x2)), "mismatch (H+W pad case)"

    # Case 2: equal spatial sizes -> lane-dense single-step channel concat.
    y1 = jax.random.normal(k3, (2, 4, 16, 16), dtype=jnp.float32)
    y2 = jax.random.normal(k4, (2, 4, 16, 16), dtype=jnp.float32)
    out2 = jax.block_until_ready(concat_and_pad2d(y1, y2))
    assert out2.shape == (2, 8, 16, 16), out2.shape
    assert jnp.array_equal(out2, _reference(y1, y2)), "mismatch (no-pad case)"

    # Case 3: same W, different H -> lane-dense path with a flat leading zero strip.
    z1 = jax.random.normal(k5, (2, 4, 16, 16), dtype=jnp.float32)
    z2 = jax.random.normal(k6, (2, 6, 12, 16), dtype=jnp.float32)
    out3 = jax.block_until_ready(concat_and_pad2d(z1, z2))
    assert out3.shape == (2, 10, 16, 16), out3.shape
    assert jnp.array_equal(out3, _reference(z1, z2)), "mismatch (H-pad lane-dense case)"

    # Case 4: realistic GAN-sized feature maps -> phased channel-tiled path.
    w1 = jax.random.normal(k7, (2, 64, 128, 128), dtype=jnp.float32)
    w2 = jax.random.normal(k8, (2, 32, 120, 128), dtype=jnp.float32)
    out4 = jax.block_until_ready(concat_and_pad2d(w1, w2))
    assert out4.shape == (2, 96, 128, 128), out4.shape
    assert jnp.array_equal(out4, _reference(w1, w2)), "mismatch (channel-tiled case)"

    print("KERNEL_OK")
</pallas_src>

<mosaic_0001>
module attributes {stable_mosaic.version = 11 : i64} {
  func.func @kernel(%arg0: i32, %arg1: memref<2x4x16x16xf32, #tpu.memory_space<vmem>>, %arg2: memref<2x6x14x12xf32, #tpu.memory_space<vmem>>, %arg3: memref<2x10x16x16xf32, #tpu.memory_space<vmem>>) attributes {dimension_semantics = [#tpu.dimension_semantics<parallel>], iteration_bounds = array<i64: 1>, scalar_prefetch = 0 : i64, scratch_operands = 0 : i64, tpu.core_type = #tpu.core_type<tc>, window_params = [{transform_indices = @transform_0, window_bounds = array<i64: 2, 4, 16, 16>}, {transform_indices = @transform_1, window_bounds = array<i64: 2, 6, 14, 12>}, {transform_indices = @transform_2, window_bounds = array<i64: 2, 10, 16, 16>}]} {
    %c0 = arith.constant 0 : index
    %c0_0 = arith.constant 0 : index
    %c0_1 = arith.constant 0 : index
    %c0_2 = arith.constant 0 : index
    %0 = vector.load %arg1[%c0, %c0_0, %c0_1, %c0_2] : memref<2x4x16x16xf32, #tpu.memory_space<vmem>>, vector<2x4x16x16xf32>
    %c0_3 = arith.constant 0 : index
    %c0_4 = arith.constant 0 : index
    %c0_5 = arith.constant 0 : index
    %c0_6 = arith.constant 0 : index
    %1 = vector.load %arg3[%c0_3, %c0_4, %c0_5, %c0_6] : memref<2x10x16x16xf32, #tpu.memory_space<vmem>>, vector<2x4x16x16xf32>
    tpu.vector_store %arg3[%c0_3, %c0_4, %c0_5, %c0_6], %0 {strides = array<i32>} : memref<2x10x16x16xf32, #tpu.memory_space<vmem>>, vector<2x4x16x16xf32>,
    %cst = arith.constant 0.000000e+00 : f32
    %2 = vector.broadcast %cst : f32 to vector<2x6x2x16xf32>
    %c0_7 = arith.constant 0 : index
    %c4 = arith.constant 4 : index
    %c0_8 = arith.constant 0 : index
    %c0_9 = arith.constant 0 : index
    %3 = vector.load %arg3[%c0_7, %c4, %c0_8, %c0_9] : memref<2x10x16x16xf32, #tpu.memory_space<vmem>>, vector<2x6x2x16xf32>
    tpu.vector_store %arg3[%c0_7, %c4, %c0_8, %c0_9], %2 {strides = array<i32>} : memref<2x10x16x16xf32, #tpu.memory_space<vmem>>, vector<2x6x2x16xf32>,
    %cst_10 = arith.constant 0.000000e+00 : f32
    %4 = vector.broadcast %cst_10 : f32 to vector<2x6x14x4xf32>
    %c0_11 = arith.constant 0 : index
    %c4_12 = arith.constant 4 : index
    %c2 = arith.constant 2 : index
    %c0_13 = arith.constant 0 : index
    %5 = vector.load %arg3[%c0_11, %c4_12, %c2, %c0_13] : memref<2x10x16x16xf32, #tpu.memory_space<vmem>>, vector<2x6x14x4xf32>
    tpu.vector_store %arg3[%c0_11, %c4_12, %c2, %c0_13], %4 {strides = array<i32>} : memref<2x10x16x16xf32, #tpu.memory_space<vmem>>, vector<2x6x14x4xf32>,
    %c0_14 = arith.constant 0 : index
    %c0_15 = arith.constant 0 : index
    %c0_16 = arith.constant 0 : index
    %c0_17 = arith.constant 0 : index
    %6 = vector.load %arg2[%c0_14, %c0_15, %c0_16, %c0_17] : memref<2x6x14x12xf32, #tpu.memory_space<vmem>>, vector<2x6x14x12xf32>
    %c0_18 = arith.constant 0 : index
    %c4_19 = arith.constant 4 : index
    %c2_20 = arith.constant 2 : index
    %c4_21 = arith.constant 4 : index
    %7 = vector.load %arg3[%c0_18, %c4_19, %c2_20, %c4_21] : memref<2x10x16x16xf32, #tpu.memory_space<vmem>>, vector<2x6x14x12xf32>
    tpu.vector_store %arg3[%c0_18, %c4_19, %c2_20, %c4_21], %6 {strides = array<i32>} : memref<2x10x16x16xf32, #tpu.memory_space<vmem>>, vector<2x6x14x12xf32>,
    return
  }
  func.func @transform_0(%arg0: i32) -> (i32, i32, i32, i32) {
    %c0_i32 = arith.constant 0 : i32
    %c0_i32_0 = arith.constant 0 : i32
    %c0_i32_1 = arith.constant 0 : i32
    %c0_i32_2 = arith.constant 0 : i32
    return %arg0, %c0_i32, %c0_i32_0, %c0_i32_1 : i32, i32, i32, i32
  }
  func.func @transform_1(%arg0: i32) -> (i32, i32, i32, i32) {
    %c0_i32 = arith.constant 0 : i32
    %c0_i32_0 = arith.constant 0 : i32
    %c0_i32_1 = arith.constant 0 : i32
    %c0_i32_2 = arith.constant 0 : i32
    return %arg0, %c0_i32, %c0_i32_0, %c0_i32_1 : i32, i32, i32, i32
  }
  func.func @transform_2(%arg0: i32) -> (i32, i32, i32, i32) {
    %c0_i32 = arith.constant 0 : i32
    %c0_i32_0 = arith.constant 0 : i32
    %c0_i32_1 = arith.constant 0 : i32
    %c0_i32_2 = arith.constant 0 : i32
    return %arg0, %c0_i32, %c0_i32_0, %c0_i32_1 : i32, i32, i32, i32
  }
}

</mosaic_0001>

<llo_original>
// kernel: tpu_custom_call.1
$region0: #{tpu_custom_call.1}
  #allocation0 [shape = 'u32[]', space=smem, size = 0x4, offset = 0x4, fixed_abs, tag = 'smem constant byte address 0x4 - core index']
  #allocation1 [shape = 'u32[144,128]{1,0:T(1,128)}', space=vmem, size = 0x12000, scoped, tag = 'internal scratch']
  %s0 = inlined_call_operand.vmem [shape: f32[2,4,16,16], index: 0, kind: input, shape index: {}]
  %s1 = inlined_call_operand.vmem [shape: f32[2,6,14,12], index: 1, kind: input, shape index: {}]
  %s2 = inlined_call_operand.hbm [shape: f32[2,10,16,16], index: 2, kind: output, shape index: {}]
  %s3 = sld [smem:[#allocation0]]
  $region18: #{tpu_custom_call.1} parent=0
    _
  %s5 = ssub.s32 1, %s3
  %s6 = scalar_select 0, %s5, %s3
  $region1: #{tpu_custom_call.1} parent=0
    #allocation2 [shape = 'u8[163840]{0}', space=vmem, size = 0x28000, scoped, tag = 'output window, operand 0, single buffered']
    #allocation3 [shape = 's32[1]{0}', space=sflag, size = 0x4, scoped, tag = 'scoped memory for tpu_custom_call.1']
    %7 = vsyncpa [#allocation3], 0
    // Predicated region
    $region2: #{tpu_custom_call.1} parent=1 // pred_check
      _
    $region3: #{tpu_custom_call.1} parent=1 // pred_check_branch
      %9 = sbr.rel (0) target = $region5
    $region4: #{tpu_custom_call.1} parent=1 // pred_region
      _
    $region5: #{tpu_custom_call.1} parent=1 // pred_fallthru
      _
    // Predicated region
    $region6: #{tpu_custom_call.1} parent=1 // pred_check
      _
    $region7: #{tpu_custom_call.1} parent=1 // pred_check_branch
      %11 = sbr.rel (0) target = $region9
    $region8: #{tpu_custom_call.1} parent=1 // pred_region
      _
    $region9: #{tpu_custom_call.1} parent=1 // pred_fallthru
      _
    %v12 = vld [vmem:[%s0] sm:$0xff]
    %v13 = vld [vmem:[%s0 + $0x8] sm:$0xff]
    %v14 = vld [vmem:[%s0 + $0x10] sm:$0xff]
    %v15 = vld [vmem:[%s0 + $0x18] sm:$0xff]
    %v16 = vld [vmem:[%s0 + $0x20] sm:$0xff]
    %v17 = vld [vmem:[%s0 + $0x28] sm:$0xff]
    %v18 = vld [vmem:[%s0 + $0x30] sm:$0xff]
    %v19 = vld [vmem:[%s0 + $0x38] sm:$0xff]
    %v20 = vld [vmem:[%s0 + $0x40] sm:$0xff]
    %v21 = vld [vmem:[%s0 + $0x48] sm:$0xff]
    %v22 = vld [vmem:[%s0 + $0x50] sm:$0xff]
    %v23 = vld [vmem:[%s0 + $0x58] sm:$0xff]
    %v24 = vld [vmem:[%s0 + $0x60] sm:$0xff]
    %v25 = vld [vmem:[%s0 + $0x68] sm:$0xff]
    %v26 = vld [vmem:[%s0 + $0x70] sm:$0xff]
    %v27 = vld [vmem:[%s0 + $0x78] sm:$0xff]
    %vm28 = vcmask 130048
    %29 = vst.msk [vmem:[#allocation2] sm:$0xff] %vm28, %v12
    %30 = vst.msk [vmem:[#allocation2 + $0x8] sm:$0xff] %vm28, %v13
    %31 = vst.msk [vmem:[#allocation2 + $0x10] sm:$0xff] %vm28, %v14
    %32 = vst.msk [vmem:[#allocation2 + $0x18] sm:$0xff] %vm28, %v15
    %33 = vst.msk [vmem:[#allocation2 + $0x20] sm:$0xff] %vm28, %v16
    %34 = vst.msk [vmem:[#allocation2 + $0x28] sm:$0xff] %vm28, %v17
    %35 = vst.msk [vmem:[#allocation2 + $0x30] sm:$0xff] %vm28, %v18
    %36 = vst.msk [vmem:[#allocation2 + $0x38] sm:$0xff] %vm28, %v19
    %37 = vst.msk [vmem:[#allocation2 + $0xa0] sm:$0xff] %vm28, %v20
    %38 = vst.msk [vmem:[#allocation2 + $0xa8] sm:$0xff] %vm28, %v21
    %39 = vst.msk [vmem:[#allocation2 + $0xb0] sm:$0xff] %vm28, %v22
    %40 = vst.msk [vmem:[#allocation2 + $0xb8] sm:$0xff] %vm28, %v23
    %41 = vst.msk [vmem:[#allocation2 + $0xc0] sm:$0xff] %vm28, %v24
    %42 = vst.msk [vmem:[#allocation2 + $0xc8] sm:$0xff] %vm28, %v25
    %43 = vst.msk [vmem:[#allocation2 + $0xd0] sm:$0xff] %vm28, %v26
    %44 = vst.msk [vmem:[#allocation2 + $0xd8] sm:$0xff] %vm28, %v27
    %s45 = scalar_lea.vmem [#allocation2], 64
    %vm46 = vcmask 123904
    %47 = vst.msk [vmem:[%s45] sm:$0x3] %vm46, 0.0
    %48 = vst.msk [vmem:[%s45 + $0x10] sm:$0x3] %vm46, 0.0
    %49 = vst.msk [vmem:[%s45 + $0x20] sm:$0x3] %vm46, 0.0
    %50 = vst.msk [vmem:[%s45 + $0x30] sm:$0x3] %vm46, 0.0
    %51 = vst.msk [vmem:[%s45 + $0x40] sm:$0x3] %vm46, 0.0
    %52 = vst.msk [vmem:[%s45 + $0x50] sm:$0x3] %vm46, 0.0
    %53 = vst.msk [vmem:[%s45 + $0xa0] sm:$0x3] %vm46, 0.0
    %54 = vst.msk [vmem:[%s45 + $0xb0] sm:$0x3] %vm46, 0.0
    %55 = vst.msk [vmem:[%s45 + $0xc0] sm:$0x3] %vm46, 0.0
    %56 = vst.msk [vmem:[%s45 + $0xd0] sm:$0x3] %vm46, 0.0
    %57 = vst.msk [vmem:[%s45 + $0xe0] sm:$0x3] %vm46, 0.0
    %58 = vst.msk [vmem:[%s45 + $0xf0] sm:$0x3] %vm46, 0.0
    %vm59 = vcmask 31744
    %60 = vst.msk [vmem:[%s45 + $0x2] sm:$0xff] %vm59, 0.0
    %vm61 = vcmask 29696
    %62 = vst.msk [vmem:[%s45 + $0xa] sm:$0x3f] %vm61, 0.0
    %63 = vst.msk [vmem:[%s45 + $0x12] sm:$0xff] %vm59, 0.0
    %64 = vst.msk [vmem:[%s45 + $0x1a] sm:$0x3f] %vm61, 0.0
    %65 = vst.msk [vmem:[%s45 + $0x22] sm:$0xff] %vm59, 0.0
    %66 = vst.msk [vmem:[%s45 + $0x2a] sm:$0x3f] %vm61, 0.0
    %67 = vst.msk [vmem:[%s45 + $0x32] sm:$0xff] %vm59, 0.0
    %68 = vst.msk [vmem:[%s45 + $0x3a] sm:$0x3f] %vm61, 0.0
    %69 = vst.msk [vmem:[%s45 + $0x42] sm:$0xff] %vm59, 0.0
    %70 = vst.msk [vmem:[%s45 + $0x4a] sm:$0x3f] %vm61, 0.0
    %71 = vst.msk [vmem:[%s45 + $0x52] sm:$0xff] %vm59, 0.0
    %72 = vst.msk [vmem:[%s45 + $0x5a] sm:$0x3f] %vm61, 0.0
    %73 = vst.msk [vmem:[%s45 + $0xa2] sm:$0xff] %vm59, 0.0
    %74 = vst.msk [vmem:[%s45 + $0xaa] sm:$0x3f] %vm61, 0.0
    %75 = vst.msk [vmem:[%s45 + $0xb2] sm:$0xff] %vm59, 0.0
    %76 = vst.msk [vmem:[%s45 + $0xba] sm:$0x3f] %vm61, 0.0
    %77 = vst.msk [vmem:[%s45 + $0xc2] sm:$0xff] %vm59, 0.0
    %78 = vst.msk [vmem:[%s45 + $0xca] sm:$0x3f] %vm61, 0.0
    %79 = vst.msk [vmem:[%s45 + $0xd2] sm:$0xff] %vm59, 0.0
    %80 = vst.msk [vmem:[%s45 + $0xda] sm:$0x3f] %vm61, 0.0
    %81 = vst.msk [vmem:[%s45 + $0xe2] sm:$0xff] %vm59, 0.0
    %82 = vst.msk [vmem:[%s45 + $0xea] sm:$0x3f] %vm61, 0.0
    %83 = vst.msk [vmem:[%s45 + $0xf2] sm:$0xff] %vm59, 0.0
    %84 = vst.msk [vmem:[%s45 + $0xfa] sm:$0x3f] %vm61, 0.0
    %v85 = vld [vmem:[%s1] sm:$0xff]
    %v86 = vld [vmem:[%s1 + $0x8] sm:$0x3f]
    %v87 = vld [vmem:[%s1 + $0x10] sm:$0xff]
    %v88 = vld [vmem:[%s1 + $0x18] sm:$0x3f]
    %v89 = vld [vmem:[%s1 + $0x20] sm:$0xff]
    %v90 = vld [vmem:[%s1 + $0x28] sm:$0x3f]
    %v91 = vld [vmem:[%s1 + $0x30] sm:$0xff]
    %v92 = vld [vmem:[%s1 + $0x38] sm:$0x3f]
    %v93 = vld [vmem:[%s1 + $0x40] sm:$0xff]
    %v94 = vld [vmem:[%s1 + $0x48] sm:$0x3f]
    %v95 = vld [vmem:[%s1 + $0x50] sm:$0xff]
    %v96 = vld [vmem:[%s1 + $0x58] sm:$0x3f]
    %v97 = vld [vmem:[%s1 + $0x60] sm:$0xff]
    %v98 = vld [vmem:[%s1 + $0x68] sm:$0x3f]
    %v99 = vld [vmem:[%s1 + $0x70] sm:$0xff]
    %v100 = vld [vmem:[%s1 + $0x78] sm:$0x3f]
    %v101 = vld [vmem:[%s1 + $0x80] sm:$0xff]
    %v102 = vld [vmem:[%s1 + $0x88] sm:$0x3f]
    %v103 = vld [vmem:[%s1 + $0x90] sm:$0xff]
    %v104 = vld [vmem:[%s1 + $0x98] sm:$0x3f]
    %v105 = vld [vmem:[%s1 + $0xa0] sm:$0xff]
    %v106 = vld [vmem:[%s1 + $0xa8] sm:$0x3f]
    %v107 = vld [vmem:[%s1 + $0xb0] sm:$0xff]
    %v108 = vld [vmem:[%s1 + $0xb8] sm:$0x3f]
    %133 = vrot.lane.b32.xlu0 %v85, 4
    %v134 = vpop.permute.xlu0 %133
    %135 = vrot.lane.b32.xlu0 %v86, 4
    %v136 = vpop.permute.xlu0 %135
    %137 = vrot.lane.b32.xlu0 %v87, 4
    %v138 = vpop.permute.xlu0 %137
    %139 = vrot.lane.b32.xlu0 %v88, 4
    %v140 = vpop.permute.xlu0 %139
    %141 = vrot.lane.b32.xlu0 %v89, 4
    %v142 = vpop.permute.xlu0 %141
    %143 = vrot.lane.b32.xlu0 %v90, 4
    %v144 = vpop.permute.xlu0 %143
    %145 = vrot.lane.b32.xlu0 %v91, 4
    %v146 = vpop.permute.xlu0 %145
    %147 = vrot.lane.b32.xlu0 %v92, 4
    %v148 = vpop.permute.xlu0 %147
    %149 = vrot.lane.b32.xlu0 %v93, 4
    %v150 = vpop.permute.xlu0 %149
    %151 = vrot.lane.b32.xlu0 %v94, 4
    %v152 = vpop.permute.xlu0 %151
    %153 = vrot.lane.b32.xlu0 %v95, 4
    %v154 = vpop.permute.xlu0 %153
    %155 = vrot.lane.b32.xlu0 %v96, 4
    %v156 = vpop.permute.xlu0 %155
    %157 = vrot.lane.b32.xlu0 %v97, 4
    %v158 = vpop.permute.xlu0 %157
    %159 = vrot.lane.b32.xlu0 %v98, 4
    %v160 = vpop.permute.xlu0 %159
    %161 = vrot.lane.b32.xlu0 %v99, 4
    %v162 = vpop.permute.xlu0 %161
    %163 = vrot.lane.b32.xlu0 %v100, 4
    %v164 = vpop.permute.xlu0 %163
    %165 = vrot.lane.b32.xlu0 %v101, 4
    %v166 = vpop.permute.xlu0 %165
    %167 = vrot.lane.b32.xlu0 %v102, 4
    %v168 = vpop.permute.xlu0 %167
    %169 = vrot.lane.b32.xlu0 %v103, 4
    %v170 = vpop.permute.xlu0 %169
    %171 = vrot.lane.b32.xlu0 %v104, 4
    %v172 = vpop.permute.xlu0 %171
    %173 = vrot.lane.b32.xlu0 %v105, 4
    %v174 = vpop.permute.xlu0 %173
    %175 = vrot.lane.b32.xlu0 %v106, 4
    %v176 = vpop.permute.xlu0 %175
    %177 = vrot.lane.b32.xlu0 %v107, 4
    %v178 = vpop.permute.xlu0 %177
    %179 = vrot.lane.b32.xlu0 %v108, 4
    %v180 = vpop.permute.xlu0 %179
    %vm205 = vcmask 130080
    %206 = vst.msk [vmem:[%s45 + $0x2] sm:$0xff] %vm205, %v134
    %vm207 = vcmask 128032
    %208 = vst.msk [vmem:[%s45 + $0xa] sm:$0x3f] %vm207, %v136
    %209 = vst.msk [vmem:[%s45 + $0x12] sm:$0xff] %vm205, %v138
    %210 = vst.msk [vmem:[%s45 + $0x1a] sm:$0x3f] %vm207, %v140
    %211 = vst.msk [vmem:[%s45 + $0x22] sm:$0xff] %vm205, %v142
    %212 = vst.msk [vmem:[%s45 + $0x2a] sm:$0x3f] %vm207, %v144
    %213 = vst.msk [vmem:[%s45 + $0x32] sm:$0xff] %vm205, %v146
    %214 = vst.msk [vmem:[%s45 + $0x3a] sm:$0x3f] %vm207, %v148
    %215 = vst.msk [vmem:[%s45 + $0x42] sm:$0xff] %vm205, %v150
    %216 = vst.msk [vmem:[%s45 + $0x4a] sm:$0x3f] %vm207, %v152
    %217 = vst.msk [vmem:[%s45 + $0x52] sm:$0xff] %vm205, %v154
    %218 = vst.msk [vmem:[%s45 + $0x5a] sm:$0x3f] %vm207, %v156
    %219 = vst.msk [vmem:[%s45 + $0xa2] sm:$0xff] %vm205, %v158
    %220 = vst.msk [vmem:[%s45 + $0xaa] sm:$0x3f] %vm207, %v160
    %221 = vst.msk [vmem:[%s45 + $0xb2] sm:$0xff] %vm205, %v162
    %222 = vst.msk [vmem:[%s45 + $0xba] sm:$0x3f] %vm207, %v164
    %223 = vst.msk [vmem:[%s45 + $0xc2] sm:$0xff] %vm205, %v166
    %224 = vst.msk [vmem:[%s45 + $0xca] sm:$0x3f] %vm207, %v168
    %225 = vst.msk [vmem:[%s45 + $0xd2] sm:$0xff] %vm205, %v170
    %226 = vst.msk [vmem:[%s45 + $0xda] sm:$0x3f] %vm207, %v172
    %227 = vst.msk [vmem:[%s45 + $0xe2] sm:$0xff] %vm205, %v174
    %228 = vst.msk [vmem:[%s45 + $0xea] sm:$0x3f] %vm207, %v176
    %229 = vst.msk [vmem:[%s45 + $0xf2] sm:$0xff] %vm205, %v178
    %230 = vst.msk [vmem:[%s45 + $0xfa] sm:$0x3f] %vm207, %v180
    // Predicated region
    $region10: #{tpu_custom_call.1} parent=1 // pred_check
      _
    $region11: #{tpu_custom_call.1} parent=1 // pred_check_branch
      %232 = sbr.rel (0) target = $region13
    $region12: #{tpu_custom_call.1} parent=1 // pred_region
      %s234 = ssub.s32 5120, 5120
      %235 = vsyncadd [#allocation3], %s234
      %s236 = sshll.u32 [#allocation2], 4
      %s237 = int_to_ptr.vmem [resolvable:$true] %s236
      %242 = dma.vmem_to_hbm [thread:$0]  %s237, 5120, %s2, [#allocation3], 128, 128, 8
    $region13: #{tpu_custom_call.1} parent=1 // pred_fallthru
      _
    // Predicated region
    $region14: #{tpu_custom_call.1} parent=1 // pred_check
      _
    $region15: #{tpu_custom_call.1} parent=1 // pred_check_branch
      %244 = sbr.rel (0) target = $region17
    $region16: #{tpu_custom_call.1} parent=1 // pred_region
      %245 = dma.done [#allocation3], 5120
    $region17: #{tpu_custom_call.1} parent=1 // pred_fallthru
      _
    %246 = vsyncpa [#allocation3], 1

</llo_original>
